<compile_context>
chip_gen: v5e
topology: v5e:2x2
jax: 0.10.0
libtpu: 0.0.40
codegen_flags: <defaults>
</compile_context>

<pallas_src>
import functools

import jax
import jax.numpy as jnp
from jax import lax
from jax.experimental import pallas as pl
from jax.experimental.pallas import tpu as pltpu

EPS = 1e-8


def _triple_sim_kernel(h_ref, r_ref, t_ref, inv_tn_ref, o_ref, *, inv_temp):
    # h_ref, r_ref: [TM, H] row tiles; t_ref: [TN, H] column tile;
    # inv_tn_ref: [1, TN] precomputed 1/||t_j||; o_ref: [TM, TN].
    #
    # Fused query: q = h + r (VPU add in the native dtype, so bf16 inputs keep
    # the bf16 MXU path; no extra HBM round trip for the sum).
    q = h_ref[...] + r_ref[...]                               # [TM, H]

    # MXU matmul with f32 accumulation; contract the last axis of BOTH
    # operands so no transpose of the t tile is ever materialized
    # (no per-step XLU transpose).
    dots = lax.dot_general(
        q, t_ref[...],
        dimension_numbers=(((1,), (1,)), ((), ())),
        preferred_element_type=jnp.float32,
    )                                                         # [TM, TN]

    # Per-row inverse L2 norm of q (f32 math; rsqrt goes to the EUP slot).
    # t norms are precomputed once in the wrapper and passed lane-major.
    qf = q.astype(jnp.float32)
    q_sq = jnp.sum(qf * qf, axis=-1, keepdims=True)           # [TM, 1]
    inv_qn = lax.rsqrt(jnp.maximum(q_sq, EPS * EPS))          # [TM, 1]

    # Broadcast multiplies instead of a full-tile divide.
    o_ref[...] = (dots * inv_qn * inv_tn_ref[...] * inv_temp).astype(o_ref.dtype)


def _pick_tile(dim, candidates=(512, 256, 128)):
    for c in candidates:
        if c <= dim and dim % c == 0:
            return c
    return dim  # fall back to the full (untiled) extent


def _as_2d(a):
    # Accept [B, H], [B, 1, H] or [1, B, H] and squeeze to [B, H].
    if a.ndim == 3:
        assert 1 in a.shape[:2]
        a = a.reshape(-1, a.shape[-1])
    assert a.ndim == 2
    return a


def triple_similarity(h, r, t, temp, *, row_tile=None, col_tile=None,
                      out_dtype=jnp.float32):
    """sim[i, j] = cos(h_i + r_i, t_j) / temp as a tiled Pallas kernel."""
    h2, r2, t2 = _as_2d(h), _as_2d(r), _as_2d(t)
    assert h2.shape == r2.shape and h2.shape[1] == t2.shape[1]
    B, H = h2.shape
    Bt = t2.shape[0]

    # Precompute inverse t-norms once (tiny, plain JAX) as a lane-major [1, Bt]
    # row so the kernel never recomputes/transposes them per grid step.
    tf = t2.astype(jnp.float32)
    inv_t_norm = lax.rsqrt(jnp.maximum(jnp.sum(tf * tf, axis=-1), EPS * EPS))
    inv_t_norm = inv_t_norm.reshape(1, Bt)

    # 2-D (row, column) tiling so h/r-tile, t-tile and output-block DMAs
    # pipeline under the matmul and per-step VMEM stays bounded on v5e/v6e/v7x.
    tm = row_tile if row_tile is not None else _pick_tile(B)
    tn = col_tile if col_tile is not None else _pick_tile(Bt)
    assert B % tm == 0 and Bt % tn == 0
    assert tm % 8 == 0 or tm == B, "row tile must be a multiple of 8 (sublane)"
    assert tn % 128 == 0 or tn == Bt, "col tile must be a multiple of 128 (lane)"

    kernel = functools.partial(_triple_sim_kernel, inv_temp=1.0 / float(temp))

    # Rough per-step VMEM footprint (double-buffered inputs + output block);
    # keep the explicit limit within v7x's smaller physical VMEM.
    in_bytes = jnp.dtype(h2.dtype).itemsize
    out_bytes = jnp.dtype(out_dtype).itemsize
    est = 2 * ((2 * tm + tn) * H * in_bytes + tn * 4 + tm * tn * out_bytes)
    vmem_limit = int(min(max(32 * 1024 * 1024, 2 * est), 48 * 1024 * 1024))

    out = pl.pallas_call(
        kernel,
        out_shape=jax.ShapeDtypeStruct((B, Bt), out_dtype),
        grid_spec=pltpu.PrefetchScalarGridSpec(
            num_scalar_prefetch=0,
            grid=(B // tm, Bt // tn),
            in_specs=[
                pl.BlockSpec((tm, H), lambda i, j: (i, 0)),   # h row tile
                pl.BlockSpec((tm, H), lambda i, j: (i, 0)),   # r row tile
                pl.BlockSpec((tn, H), lambda i, j: (j, 0)),   # t col tile
                pl.BlockSpec((1, tn), lambda i, j: (0, j)),   # 1/||t|| row
            ],
            out_specs=pl.BlockSpec((tm, tn), lambda i, j: (i, j)),
        ),
        compiler_params=pltpu.CompilerParams(
            dimension_semantics=("parallel", "parallel"),
            vmem_limit_bytes=vmem_limit,
        ),
    )(h2, r2, t2, inv_t_norm)
    return out


def triple_loss(h, r, t, temp=0.05):
    """In-batch contrastive loss on top of the kernel-computed similarities.

    The [B, B] scaled-cosine matrix is the O(B^2*H) heavy part (Pallas);
    the cross-entropy over it is O(B^2) glue and stays in plain JAX.
    """
    sim = triple_similarity(h, r, t, temp)
    B = sim.shape[0]
    logp = jax.nn.log_softmax(sim.astype(jnp.float32), axis=-1)
    return -jnp.mean(logp[jnp.arange(B), jnp.arange(B)])


def _reference_sim(h, r, t, temp):
    # Pure-JAX reference mirroring torch CosineSimilarity(dim=-1) semantics.
    q = (_as_2d(h) + _as_2d(r)).astype(jnp.float32)
    tf = _as_2d(t).astype(jnp.float32)
    num = q @ tf.T
    den = jnp.maximum(
        jnp.linalg.norm(q, axis=-1)[:, None]
        * jnp.linalg.norm(tf, axis=-1)[None, :],
        EPS,
    )
    return num / den / temp


if __name__ == "__main__":
    key = jax.random.PRNGKey(0)
    kh, kr, kt = jax.random.split(key, 3)
    temp = 0.05

    # 1) Small KG-triple shapes in f32 (single-block fallback path).
    B, H = 8, 32
    h = jax.random.normal(kh, (B, H), dtype=jnp.float32)
    r = jax.random.normal(kr, (B, H), dtype=jnp.float32)
    t = jax.random.normal(kt, (B, H), dtype=jnp.float32)
    sim = jax.block_until_ready(triple_similarity(h, r, t, temp))
    ref = _reference_sim(h, r, t, temp)
    assert sim.shape == (B, B)
    assert jnp.allclose(sim, ref, atol=1e-4, rtol=1e-4)

    loss = jax.block_until_ready(triple_loss(h, r, t, temp))
    assert loss.shape == () and jnp.isfinite(loss)

    # 2) bf16 inputs on a real 2-D tiled grid (bf16-native MXU path).
    B2, H2 = 256, 128
    hb = jax.random.normal(kh, (B2, H2), dtype=jnp.bfloat16)
    rb = jax.random.normal(kr, (B2, H2), dtype=jnp.bfloat16)
    tb = jax.random.normal(kt, (B2, H2), dtype=jnp.bfloat16)
    sim2 = jax.block_until_ready(
        triple_similarity(hb, rb, tb, temp, row_tile=128, col_tile=128))
    ref2 = _reference_sim(hb, rb, tb, temp)
    assert sim2.shape == (B2, B2)
    assert jnp.allclose(sim2, ref2, atol=1e-2, rtol=1e-2)

    print("KERNEL_OK")
</pallas_src>

<mosaic_0001>
module attributes {stable_mosaic.version = 11 : i64} {
  func.func @_triple_sim_kernel(%arg0: i32, %arg1: i32, %arg2: memref<8x32xf32, #tpu.memory_space<vmem>>, %arg3: memref<8x32xf32, #tpu.memory_space<vmem>>, %arg4: memref<8x32xf32, #tpu.memory_space<vmem>>, %arg5: memref<1x8xf32, #tpu.memory_space<vmem>>, %arg6: memref<8x8xf32, #tpu.memory_space<vmem>>) attributes {dimension_semantics = [#tpu.dimension_semantics<parallel>, #tpu.dimension_semantics<parallel>], iteration_bounds = array<i64: 1, 1>, scalar_prefetch = 0 : i64, scratch_operands = 0 : i64, tpu.core_type = #tpu.core_type<tc>, window_params = [{transform_indices = @transform_0, window_bounds = array<i64: 8, 32>}, {transform_indices = @transform_1, window_bounds = array<i64: 8, 32>}, {transform_indices = @transform_2, window_bounds = array<i64: 8, 32>}, {transform_indices = @transform_3, window_bounds = array<i64: 1, 8>}, {transform_indices = @transform_4, window_bounds = array<i64: 8, 8>}]} {
    %c0 = arith.constant 0 : index
    %c0_0 = arith.constant 0 : index
    %0 = vector.load %arg2[%c0, %c0_0] : memref<8x32xf32, #tpu.memory_space<vmem>>, vector<8x32xf32>
    %c0_1 = arith.constant 0 : index
    %c0_2 = arith.constant 0 : index
    %1 = vector.load %arg3[%c0_1, %c0_2] : memref<8x32xf32, #tpu.memory_space<vmem>>, vector<8x32xf32>
    %2 = arith.addf %0, %1 : vector<8x32xf32>
    %c0_3 = arith.constant 0 : index
    %c0_4 = arith.constant 0 : index
    %3 = vector.load %arg4[%c0_3, %c0_4] : memref<8x32xf32, #tpu.memory_space<vmem>>, vector<8x32xf32>
    %cst = arith.constant dense<0.000000e+00> : vector<8x8xf32>
    %4 = tpu.matmul %2, %3, %cst {dimension_numbers = #tpu.dot_dimension_numbers<[1], [1], [0], [0], [0, 0, 1, 0], [], []>} : vector<8x32xf32>, vector<8x32xf32>, vector<8x8xf32> -> vector<8x8xf32>
    %5 = arith.mulf %2, %2 : vector<8x32xf32>
    %cst_5 = arith.constant dense<0.000000e+00> : vector<8xf32>
    %6 = vector.multi_reduction <add>, %5, %cst_5 [1] : vector<8x32xf32> to vector<8xf32>
    %7 = vector.shape_cast %6 : vector<8xf32> to vector<8x1xf32>
    %cst_6 = arith.constant 1.000000e-16 : f32
    %8 = vector.broadcast %cst_6 : f32 to vector<8x1xf32>
    %9 = arith.maximumf %7, %8 : vector<8x1xf32>
    %10 = math.rsqrt %9 : vector<8x1xf32>
    %11 = vector.broadcast %10 : vector<8x1xf32> to vector<8x8xf32>
    %12 = arith.mulf %4, %11 : vector<8x8xf32>
    %c0_7 = arith.constant 0 : index
    %c0_8 = arith.constant 0 : index
    %13 = vector.load %arg5[%c0_7, %c0_8] : memref<1x8xf32, #tpu.memory_space<vmem>>, vector<1x8xf32>
    %14 = vector.broadcast %13 : vector<1x8xf32> to vector<8x8xf32>
    %15 = arith.mulf %12, %14 : vector<8x8xf32>
    %cst_9 = arith.constant 2.000000e+01 : f32
    %16 = vector.broadcast %cst_9 : f32 to vector<8x8xf32>
    %17 = arith.mulf %15, %16 : vector<8x8xf32>
    %c0_10 = arith.constant 0 : index
    %c0_11 = arith.constant 0 : index
    %18 = vector.load %arg6[%c0_10, %c0_11] : memref<8x8xf32, #tpu.memory_space<vmem>>, vector<8x8xf32>
    tpu.vector_store %arg6[%c0_10, %c0_11], %17 {strides = array<i32>} : memref<8x8xf32, #tpu.memory_space<vmem>>, vector<8x8xf32>,
    return
  }
  func.func @transform_0(%arg0: i32, %arg1: i32) -> (i32, i32) {
    %c0_i32 = arith.constant 0 : i32
    %c0_i32_0 = arith.constant 0 : i32
    return %arg0, %c0_i32 : i32, i32
  }
  func.func @transform_1(%arg0: i32, %arg1: i32) -> (i32, i32) {
    %c0_i32 = arith.constant 0 : i32
    %c0_i32_0 = arith.constant 0 : i32
    return %arg0, %c0_i32 : i32, i32
  }
  func.func @transform_2(%arg0: i32, %arg1: i32) -> (i32, i32) {
    %c0_i32 = arith.constant 0 : i32
    %c0_i32_0 = arith.constant 0 : i32
    return %arg1, %c0_i32 : i32, i32
  }
  func.func @transform_3(%arg0: i32, %arg1: i32) -> (i32, i32) {
    %c0_i32 = arith.constant 0 : i32
    %c0_i32_0 = arith.constant 0 : i32
    return %c0_i32, %arg1 : i32, i32
  }
  func.func @transform_4(%arg0: i32, %arg1: i32) -> (i32, i32) {
    %c0_i32 = arith.constant 0 : i32
    return %arg0, %arg1 : i32, i32
  }
}

</mosaic_0001>

<llo_original>
// kernel: tpu_custom_call.1
$region0: #{tpu_custom_call.1}
  #allocation0 [shape = 'u32[]', space=smem, size = 0x4, offset = 0x4, fixed_abs, tag = 'smem constant byte address 0x4 - core index']
  #allocation1 [shape = 'u32[72,128]{1,0:T(1,128)}', space=vmem, size = 0x9000, scoped, tag = 'internal scratch']
  %s0 = inlined_call_operand.hbm [shape: f32[8,32], index: 0, kind: input, shape index: {}]
  %s1 = inlined_call_operand.hbm [shape: f32[8,32], index: 1, kind: input, shape index: {}]
  %s2 = inlined_call_operand.hbm [shape: f32[8,32], index: 2, kind: input, shape index: {}]
  %s3 = inlined_call_operand.vmem [shape: f32[1,8], index: 3, kind: input, shape index: {}]
  %s4 = inlined_call_operand.hbm [shape: f32[8,8], index: 4, kind: output, shape index: {}]
  %s5 = sld [smem:[#allocation0]]
  $region38: #{tpu_custom_call.1} parent=0
    _
  %s7 = ssub.s32 1, %s5
  %s8 = scalar_select 0, %s7, %s5
  $region1: #{tpu_custom_call.1} parent=0
    #allocation2 [shape = 'u8[4096]{0}', space=vmem, size = 0x1000, scoped, tag = 'input window, operand 0, single buffered']
    #allocation3 [shape = 's32[1]{0}', space=sflag, size = 0x4, scoped, tag = 'scoped memory for tpu_custom_call.1']
    #allocation4 [shape = 's32[1]{0}', space=sflag, size = 0x4, scoped, tag = 'scoped memory for tpu_custom_call.1']
    #allocation5 [shape = 'u8[4096]{0}', space=vmem, size = 0x1000, scoped, tag = 'input window, operand 1, single buffered']
    #allocation6 [shape = 's32[1]{0}', space=sflag, size = 0x4, scoped, tag = 'scoped memory for tpu_custom_call.1']
    #allocation7 [shape = 'u8[4096]{0}', space=vmem, size = 0x1000, scoped, tag = 'input window, operand 2, single buffered']
    #allocation8 [shape = 'u8[4096]{0}', space=vmem, size = 0x1000, scoped, tag = 'output window, operand 0, single buffered']
    %9 = vsyncpa [#allocation3], 0
    %10 = vsyncpa [#allocation6], 0
    %11 = vsyncpa [#allocation4], 0
    // Predicated region
    $region2: #{tpu_custom_call.1} parent=1 // pred_check
      _
    $region3: #{tpu_custom_call.1} parent=1 // pred_check_branch
      %13 = sbr.rel (0) target = $region5
    $region4: #{tpu_custom_call.1} parent=1 // pred_region
      %15 = vsyncadd [#allocation3], 0
      %s17 = sshll.u32 %s0, 4
      %s18 = int_to_ptr.hbm [resolvable:$true] %s17
      %s19 = sshll.u32 [#allocation2], 4
      %s20 = int_to_ptr.vmem [resolvable:$true] %s19
      %22 = dma.hbm_to_vmem [thread:$0]  %s18, 128, %s20, [#allocation3]
    $region5: #{tpu_custom_call.1} parent=1 // pred_fallthru
      _
    // Predicated region
    $region6: #{tpu_custom_call.1} parent=1 // pred_check
      _
    $region7: #{tpu_custom_call.1} parent=1 // pred_check_branch
      %24 = sbr.rel (0) target = $region9
    $region8: #{tpu_custom_call.1} parent=1 // pred_region
      %26 = vsyncadd [#allocation6], 0
      %s28 = sshll.u32 %s1, 4
      %s29 = int_to_ptr.hbm [resolvable:$true] %s28
      %s30 = sshll.u32 [#allocation5], 4
      %s31 = int_to_ptr.vmem [resolvable:$true] %s30
      %33 = dma.hbm_to_vmem [thread:$0]  %s29, 128, %s31, [#allocation6]
    $region9: #{tpu_custom_call.1} parent=1 // pred_fallthru
      _
    // Predicated region
    $region10: #{tpu_custom_call.1} parent=1 // pred_check
      _
    $region11: #{tpu_custom_call.1} parent=1 // pred_check_branch
      %35 = sbr.rel (0) target = $region13
    $region12: #{tpu_custom_call.1} parent=1 // pred_region
      %37 = vsyncadd [#allocation6], 0
      %s39 = sshll.u32 %s2, 4
      %s40 = int_to_ptr.hbm [resolvable:$true] %s39
      %s41 = sshll.u32 [#allocation7], 4
      %s42 = int_to_ptr.vmem [resolvable:$true] %s41
      %44 = dma.hbm_to_vmem [thread:$0]  %s40, 128, %s42, [#allocation6]
    $region13: #{tpu_custom_call.1} parent=1 // pred_fallthru
      _
    // Predicated region
    $region14: #{tpu_custom_call.1} parent=1 // pred_check
      _
    $region15: #{tpu_custom_call.1} parent=1 // pred_check_branch
      %46 = sbr.rel (0) target = $region17
    $region16: #{tpu_custom_call.1} parent=1 // pred_region
      _
    $region17: #{tpu_custom_call.1} parent=1 // pred_fallthru
      _
    // Predicated region
    $region18: #{tpu_custom_call.1} parent=1 // pred_check
      _
    $region19: #{tpu_custom_call.1} parent=1 // pred_check_branch
      %48 = sbr.rel (0) target = $region21
    $region20: #{tpu_custom_call.1} parent=1 // pred_region
      %50 = dma.done [#allocation3], 128
    $region21: #{tpu_custom_call.1} parent=1 // pred_fallthru
      _
    // Predicated region
    $region22: #{tpu_custom_call.1} parent=1 // pred_check
      _
    $region23: #{tpu_custom_call.1} parent=1 // pred_check_branch
      %52 = sbr.rel (0) target = $region25
    $region24: #{tpu_custom_call.1} parent=1 // pred_region
      %54 = dma.done [#allocation6], 128
    $region25: #{tpu_custom_call.1} parent=1 // pred_fallthru
      _
    // Predicated region
    $region26: #{tpu_custom_call.1} parent=1 // pred_check
      _
    $region27: #{tpu_custom_call.1} parent=1 // pred_check_branch
      %56 = sbr.rel (0) target = $region29
    $region28: #{tpu_custom_call.1} parent=1 // pred_region
      %58 = dma.done [#allocation6], 128
    $region29: #{tpu_custom_call.1} parent=1 // pred_fallthru
      _
    %v59 = vld [vmem:[#allocation2] sm:$0xff]
    %v60 = vld [vmem:[#allocation5] sm:$0xff]
    %v61 = vadd.f32 %v59, %v60
    %v62 = vld [vmem:[#allocation7] sm:$0xff]
    %vm63 = vcmask 261120
    %v65 = vsel %vm63, %v61, 0
    %v68 = vsel %vm63, %v62, 0
    %70 = vmatpush.xpose.msra.mxu0 0.0
    %71 = vmatpush.xpose.msra.mxu0 0.0
    %72 = vmatpush.xpose.msra.mxu0 0.0
    %73 = vmatpush.xpose.msra.mxu0 0.0
    %74 = vmatpush.xpose.msra.mxu0 0.0
    %75 = vmatpush.xpose.msra.mxu0 0.0
    %76 = vmatpush.xpose.msra.mxu0 0.0
    %77 = vmatpush.xpose.msra.mxu0 0.0
    %78 = vmatpush.xpose.msra.mxu0 0.0
    %79 = vmatpush.xpose.msra.mxu0 0.0
    %80 = vmatpush.xpose.msra.mxu0 0.0
    %81 = vmatpush.xpose.msra.mxu0 0.0
    %82 = vmatpush.xpose.msra.mxu0 0.0
    %83 = vmatpush.xpose.msra.mxu0 0.0
    %84 = vmatpush.xpose.msra.mxu0 0.0
    %85 = vmatpush.xpose.msra.mxu0 %v68
    %86 = vmatmul.f32.gmra.mxu0 %v65
    %v87 = vpop.f32.mrf.mxu0
    %v88 = vadd.f32 0.0, %v87
    %89 = vdwg.mxu0
    %v90 = vmul.f32 %v61, %v61
    %v91 = vsel %vm63, %v90, 0.0
    %92 = vadd.xlane.f32.xlu0 %v91
    %v93 = vpop.xlane.xlu0 %92
    %v94 = vmax.f32 %v93, 1e-16
    %v95 = vrsqrt.pop %v94
    %v96 = vmul.f32 %v95, %v94
    %v97 = vmul.f32 %v96, %v95
    %v98 = vmul.f32 0.5, %v97
    %v99 = vsub.f32 1.5, %v98
    %v100 = vmul.f32 %v95, %v99
    %vm101 = vweird.f32 %v94
    %vm102 = vweird.f32 %v95
    %vm103 = vmor %vm101, %vm102
    %v104 = vsel %vm103, %v95, %v100
    %v105 = vmul.f32 %v88, %v104
    %v106 = vld [vmem:[%s3] sm:$0x1]
    %v108 = vperm.slane %v106, 0
    %v110 = vmul.f32 %v105, %v108
    %v111 = vmul.f32 %v110, 20.0
    %vm112 = vcmask 64512
    %113 = vst.msk [vmem:[#allocation8] sm:$0xff] %vm112, %v111
    // Predicated region
    $region30: #{tpu_custom_call.1} parent=1 // pred_check
      _
    $region31: #{tpu_custom_call.1} parent=1 // pred_check_branch
      %115 = sbr.rel (0) target = $region33
    $region32: #{tpu_custom_call.1} parent=1 // pred_region
      %117 = vsyncadd [#allocation4], 0
      %s119 = sshll.u32 [#allocation8], 4
      %s120 = int_to_ptr.vmem [resolvable:$true] %s119
      %s121 = sshll.u32 %s4, 4
      %s122 = int_to_ptr.hbm [resolvable:$true] %s121
      %124 = dma.vmem_to_hbm [thread:$0]  %s120, 128, %s122, [#allocation4]
    $region33: #{tpu_custom_call.1} parent=1 // pred_fallthru
      _
    // Predicated region
    $region34: #{tpu_custom_call.1} parent=1 // pred_check
      _
    $region35: #{tpu_custom_call.1} parent=1 // pred_check_branch
      %126 = sbr.rel (0) target = $region37
    $region36: #{tpu_custom_call.1} parent=1 // pred_region
      %128 = dma.done [#allocation4], 128
    $region37: #{tpu_custom_call.1} parent=1 // pred_fallthru
      _
    %129 = vsyncpa [#allocation3], 1
    %130 = vsyncpa [#allocation6], 1
    %131 = vsyncpa [#allocation4], 1

</llo_original>
